<compile_context>
chip_gen: v7x
topology: tpu7x:2x2x1
jax: 0.10.0
libtpu: 0.0.40
codegen_flags: <defaults>
</compile_context>

<pallas_src>
import functools

import jax
import jax.numpy as jnp
import numpy as np
from jax.experimental import pallas as pl
from jax.experimental.pallas import tpu as pltpu


_LANE = 128
_SUBLANE = 8
_MIB = 1024 * 1024
_MIN_BLOCK_BYTES = 512 * 1024          # per-block floor for the >=4-step cap


def _round_up(x, m):
    return ((x + m - 1) // m) * m


def _vmem_budgets():
    """(block_budget_bytes, vmem_limit_bytes) for the local TPU generation."""
    vmem_cap = None
    try:
        info = pltpu.get_tpu_info()
        vmem_cap = getattr(info, "vmem_capacity_bytes", None)
    except Exception:
        vmem_cap = None
    if vmem_cap is not None and vmem_cap <= 64 * _MIB:
        # v7x-class: 64 MiB/TC. Keep 2x(in+out) double-buffering well clear of
        # the ~48 MiB compile-failure zone.
        return 7 * _MIB, 44 * _MIB
    if vmem_cap is not None:
        # v5e / v6e: 128 MiB physical VMEM.
        return 12 * _MIB, 64 * _MIB
    # Unknown backend (interpret mode / old jax): conservative middle ground.
    return 8 * _MIB, 48 * _MIB


# ---------------------------------------------------------------------------
# Kernels
# ---------------------------------------------------------------------------

def _single_pass_kernel(x_ref, o_ref, *, inv_s):
    # x_ref: [b, S_pad] or [b, r, 128]; one row per (batch, group) slab.
    x = x_ref[...]
    reduce_axes = tuple(range(1, x.ndim))
    # Reduction accumulates in f32; the max runs in the I/O dtype (re-read the
    # ref, no full-block f32 temporary with two consumers).
    total = jnp.sum(x, axis=reduce_axes, keepdims=True, dtype=jnp.float32)
    m = total * jnp.float32(inv_s)
    o_ref[...] = jnp.maximum(x_ref[...], m.astype(o_ref.dtype))


def _sum_kernel(x_ref, sum_ref):
    # x_ref: [1, rc, 128] chunk of one row; sum_ref: [1, 1, 1] f32 accumulator
    # resident across the (last, "arbitrary") chunk axis.
    @pl.when(pl.program_id(1) == 0)
    def _():
        sum_ref[...] = jnp.zeros_like(sum_ref)

    sum_ref[...] += jnp.sum(
        x_ref[...], axis=(0, 1, 2), keepdims=True, dtype=jnp.float32)


def _apply_kernel(x_ref, sum_ref, o_ref, *, inv_s):
    # x_ref / o_ref: [1, rc, 128]; sum_ref: [1, 1, 1] per-row f32 sum.
    m = sum_ref[...] * jnp.float32(inv_s)
    o_ref[...] = jnp.maximum(x_ref[...], m.astype(o_ref.dtype))


# ---------------------------------------------------------------------------
# Wrapper
# ---------------------------------------------------------------------------

@functools.partial(jax.jit, static_argnames=("groups", "force_two_phase"))
def equivariant_relu(x, *, groups, force_two_phase=False):
    """x: [N, C, H, W] (or any shape with a leading batch dim), float dtype."""
    orig_shape = x.shape
    n = orig_shape[0]
    g = groups
    total = int(np.prod(orig_shape))
    ng = n * g
    s = total // ng                        # elements per (batch, group) slab
    itemsize = jnp.dtype(x.dtype).itemsize

    block_budget, vmem_limit = _vmem_budgets()

    # Lane-dense layout: pad each slab up to a multiple of 128 with zeros
    # (the mean always uses the true divisor 1/s, so padding is harmless).
    s_pad = _round_up(s, _LANE)
    row_bytes = s_pad * itemsize
    inv_s = 1.0 / s

    # If even a single double-buffered row (in + out) would blow the VMEM
    # limit, stream it in chunks with the two-phase path.
    two_phase = force_two_phase or (4 * row_bytes > vmem_limit - 4 * _MIB)

    if not two_phase:
        x2 = x.reshape(ng, s)
        if s_pad != s:
            x2 = jnp.pad(x2, ((0, 0), (0, s_pad - s)))

        # Rows (group slabs) per block, bounded by the VMEM budget.
        b = max(1, block_budget // row_bytes)
        # Keep >= 4 grid steps on large problems (megacore sharding + DMA
        # pipelining on v7x), with a ~512 KiB per-block floor.
        floor_rows = max(1, _MIN_BLOCK_BYTES // row_bytes)
        b = min(b, max(-(-ng // 4), floor_rows))
        b = min(b, ng)

        if b >= _SUBLANE or b == ng:
            # 2-D lane+sublane-dense layout (preferred).
            if b != ng:
                b = (b // _SUBLANE) * _SUBLANE
            x_view = x2
            block_shape = (b, s_pad)
            index_map = lambda i: (i, 0)
        else:
            # Rows are so large that b < 8: pack each row as [r, 128] so the
            # minor-two dims stay dense regardless of b.
            r = s_pad // _LANE
            x_view = x2.reshape(ng, r, _LANE)
            block_shape = (b, r, _LANE)
            index_map = lambda i: (i, 0, 0)

        grid = (pl.cdiv(ng, b),)
        out = pl.pallas_call(
            functools.partial(_single_pass_kernel, inv_s=inv_s),
            out_shape=jax.ShapeDtypeStruct(x_view.shape, x.dtype),
            grid=grid,
            in_specs=[pl.BlockSpec(block_shape, index_map)],
            out_specs=pl.BlockSpec(block_shape, index_map),
            compiler_params=pltpu.CompilerParams(
                dimension_semantics=("parallel",),
                vmem_limit_bytes=vmem_limit,
            ),
            cost_estimate=pl.CostEstimate(
                flops=2 * ng * s_pad,
                transcendentals=0,
                bytes_accessed=2 * ng * s_pad * itemsize,
            ),
        )(x_view)

        out = out.reshape(ng, s_pad)
        if s_pad != s:
            out = out[:, :s]
        return out.reshape(orig_shape)

    # ------------------------------------------------------------------
    # Two-phase path: each row is streamed in [rc, 128] chunks.
    # Phase 1 computes per-row sums (chunk axis "arbitrary"), phase 2 applies
    # maximum(x, mean) chunk by chunk.
    # ------------------------------------------------------------------
    r = s_pad // _LANE
    rc = max(_SUBLANE,
             (block_budget // (_LANE * itemsize)) // _SUBLANE * _SUBLANE)
    rc = min(rc, _round_up(r, _SUBLANE))
    r_pad = _round_up(r, rc)
    s_pad2 = r_pad * _LANE

    x2 = x.reshape(ng, s)
    if s_pad2 != s:
        x2 = jnp.pad(x2, ((0, 0), (0, s_pad2 - s)))
    x_view = x2.reshape(ng, r_pad, _LANE)
    n_chunks = r_pad // rc

    sums = pl.pallas_call(
        _sum_kernel,
        out_shape=jax.ShapeDtypeStruct((ng, 1, 1), jnp.float32),
        grid=(ng, n_chunks),
        in_specs=[pl.BlockSpec((1, rc, _LANE), lambda i, j: (i, j, 0))],
        out_specs=pl.BlockSpec((1, 1, 1), lambda i, j: (i, 0, 0)),
        compiler_params=pltpu.CompilerParams(
            dimension_semantics=("parallel", "arbitrary"),
            vmem_limit_bytes=vmem_limit,
        ),
        cost_estimate=pl.CostEstimate(
            flops=ng * s_pad2,
            transcendentals=0,
            bytes_accessed=ng * s_pad2 * itemsize,
        ),
    )(x_view)

    out = pl.pallas_call(
        functools.partial(_apply_kernel, inv_s=inv_s),
        out_shape=jax.ShapeDtypeStruct(x_view.shape, x.dtype),
        grid=(ng, n_chunks),
        in_specs=[pl.BlockSpec((1, rc, _LANE), lambda i, j: (i, j, 0)),
                  pl.BlockSpec((1, 1, 1), lambda i, j: (i, 0, 0))],
        out_specs=pl.BlockSpec((1, rc, _LANE), lambda i, j: (i, j, 0)),
        compiler_params=pltpu.CompilerParams(
            dimension_semantics=("parallel", "parallel"),
            vmem_limit_bytes=vmem_limit,
        ),
        cost_estimate=pl.CostEstimate(
            flops=ng * s_pad2,
            transcendentals=0,
            bytes_accessed=2 * ng * s_pad2 * itemsize,
        ),
    )(x_view, sums)

    out = out.reshape(ng, s_pad2)[:, :s]
    return out.reshape(orig_shape)


def equivariant_relu_ref(x, *, groups):
    """Pure-JAX reference mirroring the PyTorch forward."""
    n = x.shape[0]
    y = x.reshape(n, groups, -1)
    m = y.mean(axis=2, keepdims=True)
    return jnp.maximum(y, m).reshape(x.shape)


if __name__ == "__main__":
    # Small shapes consistent with the module: N=2, C=4 channels, G=2 groups,
    # 16x16 spatial.
    N, C, H, W = 2, 4, 16, 16
    G = 2

    key = jax.random.PRNGKey(0)
    x = jax.random.normal(key, (N, C, H, W), dtype=jnp.float32)

    ref = equivariant_relu_ref(x, groups=G)

    # Single-pass (default) path.
    out = jax.block_until_ready(equivariant_relu(x, groups=G))
    np.testing.assert_allclose(np.asarray(out), np.asarray(ref),
                               rtol=1e-5, atol=1e-5)

    # Exercise the large-S two-phase fallback on the same small shape.
    out2 = jax.block_until_ready(
        equivariant_relu(x, groups=G, force_two_phase=True))
    np.testing.assert_allclose(np.asarray(out2), np.asarray(ref),
                               rtol=1e-5, atol=1e-5)

    # Non-128-multiple slab (S = 75 -> padded to 128) exercises the lane-pad
    # path with the true-divisor mean.
    x_odd = jax.random.normal(jax.random.PRNGKey(1), (2, 6, 5, 5),
                              dtype=jnp.float32)
    out3 = jax.block_until_ready(equivariant_relu(x_odd, groups=2))
    ref3 = equivariant_relu_ref(x_odd, groups=2)
    np.testing.assert_allclose(np.asarray(out3), np.asarray(ref3),
                               rtol=1e-5, atol=1e-5)

    print("KERNEL_OK")
</pallas_src>

<mosaic_0001>
module attributes {stable_mosaic.version = 11 : i64} {
  func.func @_single_pass_kernel(%arg0: i32, %arg1: memref<4x512xf32, #tpu.memory_space<vmem>>, %arg2: memref<4x512xf32, #tpu.memory_space<vmem>>) attributes {dimension_semantics = [#tpu.dimension_semantics<parallel>], iteration_bounds = array<i64: 1>, scalar_prefetch = 0 : i64, scratch_operands = 0 : i64, tpu.core_type = #tpu.core_type<tc>, window_params = [{transform_indices = @transform_0, window_bounds = array<i64: 4, 512>}, {transform_indices = @transform_1, window_bounds = array<i64: 4, 512>}]} {
    %c0 = arith.constant 0 : index
    %c0_0 = arith.constant 0 : index
    %0 = vector.load %arg1[%c0, %c0_0] : memref<4x512xf32, #tpu.memory_space<vmem>>, vector<4x512xf32>
    %cst = arith.constant dense<0.000000e+00> : vector<4xf32>
    %1 = vector.multi_reduction <add>, %0, %cst [1] : vector<4x512xf32> to vector<4xf32>
    %2 = vector.shape_cast %1 : vector<4xf32> to vector<4x1xf32>
    %cst_1 = arith.constant 0.001953125 : f32
    %3 = vector.broadcast %cst_1 : f32 to vector<4x1xf32>
    %4 = arith.mulf %2, %3 : vector<4x1xf32>
    %c0_2 = arith.constant 0 : index
    %c0_3 = arith.constant 0 : index
    %5 = vector.load %arg1[%c0_2, %c0_3] : memref<4x512xf32, #tpu.memory_space<vmem>>, vector<4x512xf32>
    %6 = vector.broadcast %4 : vector<4x1xf32> to vector<4x512xf32>
    %7 = arith.maximumf %5, %6 : vector<4x512xf32>
    %c0_4 = arith.constant 0 : index
    %c0_5 = arith.constant 0 : index
    %8 = vector.load %arg2[%c0_4, %c0_5] : memref<4x512xf32, #tpu.memory_space<vmem>>, vector<4x512xf32>
    tpu.vector_store %arg2[%c0_4, %c0_5], %7 {strides = array<i32>} : memref<4x512xf32, #tpu.memory_space<vmem>>, vector<4x512xf32>,
    return
  }
  func.func @transform_0(%arg0: i32) -> (i32, i32) {
    %c0_i32 = arith.constant 0 : i32
    %c0_i32_0 = arith.constant 0 : i32
    return %arg0, %c0_i32 : i32, i32
  }
  func.func @transform_1(%arg0: i32) -> (i32, i32) {
    %c0_i32 = arith.constant 0 : i32
    %c0_i32_0 = arith.constant 0 : i32
    return %arg0, %c0_i32 : i32, i32
  }
}

</mosaic_0001>

<llo_original>
// kernel: equivariant_relu.1
$region0: #{equivariant_relu.1}
  #allocation0 [shape = 'u32[]', space=smem, size = 0x4, offset = 0x4, fixed_abs, tag = 'smem constant byte address 0x4 - core index']
  #allocation1 [shape = 'u32[144,128]{1,0:T(1,128)}', space=vmem, size = 0x12000, scoped, tag = 'internal scratch']
  %s0 = inlined_call_operand.vmem [shape: f32[4,512], index: 0, kind: input, shape index: {}]
  %s1 = inlined_call_operand.vmem [shape: f32[4,512], index: 1, kind: output, shape index: {}]
  %s2 = sld [smem:[#allocation0]]
  $region14: #{equivariant_relu.1} parent=0
    _
  %s4 = ssub.s32 1, %s2
  %s5 = scalar_select 0, %s4, %s2
  // Predicated region
  $region2: #{equivariant_relu.1} parent=0 // pred_check
    _
  $region3: #{equivariant_relu.1} parent=0 // pred_check_branch
    %7 = sbr.rel (0) target = $region5
  $region4: #{equivariant_relu.1} parent=0 // pred_region
    _
  $region5: #{equivariant_relu.1} parent=0 // pred_fallthru
    _
  %v8 = vld [vmem:[%s0] sm:$0xff]
  %v9 = vld [vmem:[%s0 + $0x8] sm:$0xff]
  %v12 = vcombine.high %v8, %v8
  %v13 = vcombine.high %v9, %v9
  %vm16 = vcmask 1043456
  %v17 = vsel %vm16, %v8, 0.0
  %v18 = vsel %vm16, %v12, 0.0
  %v19 = vadd.f32 %v17, %v18
  %v20 = vsel %vm16, %v9, 0.0
  %v21 = vadd.f32 %v19, %v20
  %v22 = vsel %vm16, %v13, 0.0
  %v23 = vadd.f32 %v21, %v22
  %24 = vadd.xlane.f32.xlu0 %v23
  %v25 = vpop.xlane.xlu0 %24
  %v26 = vmul.f32 %v25, 0.001953125
  %v29 = vunpack.c.l.s4 839922192
  %v30 = vunpack.c.0.s8 %v29
  %v31 = vlaneseq
  %v32 = vshrl.u32 %v31, 7
  %v33 = vsub.s32 %v30, %v32
  %v34 = vrot.slane %v26, %v33
  %v36 = vmax.f32 %v8, %v34
  %v37 = vmax.f32 %v9, %v34
  %38 = vst [vmem:[%s1] sm:$0xff] %v36
  %39 = vst [vmem:[%s1 + $0x8] sm:$0xff] %v37
  // Predicated region
  $region6: #{equivariant_relu.1} parent=0 // pred_check
    _
  $region7: #{equivariant_relu.1} parent=0 // pred_check_branch
    %41 = sbr.rel (0) target = $region9
  $region8: #{equivariant_relu.1} parent=0 // pred_region
    _
  $region9: #{equivariant_relu.1} parent=0 // pred_fallthru
    _
  // Predicated region
  $region10: #{equivariant_relu.1} parent=0 // pred_check
    _
  $region11: #{equivariant_relu.1} parent=0 // pred_check_branch
    %43 = sbr.rel (0) target = $region13
  $region12: #{equivariant_relu.1} parent=0 // pred_region
    _
  $region13: #{equivariant_relu.1} parent=0 // pred_fallthru
    _

</llo_original>
